<compile_context>
chip_gen: v7x
topology: tpu7x:2x2x1
jax: 0.10.0
libtpu: 0.0.40
codegen_flags: <defaults>
</compile_context>

<pallas_src>
import functools

import jax
import jax.numpy as jnp
from jax.experimental import pallas as pl
from jax.experimental.pallas import tpu as pltpu

_HIDDEN = 256  # fixed by the module


def _round_up(x, m):
    return ((x + m - 1) // m) * m


def _mlp_kernel(x_ref, w1_ref, b1_ref, w2_ref, b2_ref, o_ref):
    # Hidden layer: x @ W1 + b1, ReLU.  Cast the x tile to the weight dtype so
    # bf16 params take the native bf16 MXU path; accumulate in f32 and keep
    # the bias-add / ReLU in f32 (fast path on v5e's VPU too).
    x = x_ref[...].astype(w1_ref.dtype)
    h = jnp.dot(x, w1_ref[...], preferred_element_type=jnp.float32)
    h = jnp.maximum(h + b1_ref[...], 0.0)
    # Output layer: h @ W2 + b2.
    out = jnp.dot(h.astype(w2_ref.dtype), w2_ref[...],
                  preferred_element_type=jnp.float32)
    o_ref[...] = (out + b2_ref[...]).astype(o_ref.dtype)


def prepare_params(w1, b1, w2, b2, param_dtype=jnp.float32):
    """One-time (outside the hot call) param layout/cast.

    w1: (state_size, 256), b1: (256,), w2: (256, action_size), b2: (action_size,)
    (weights already transposed vs. PyTorch's (out, in) convention).
    """
    return (w1.astype(param_dtype),
            b1.astype(jnp.float32).reshape(1, _HIDDEN),
            w2.astype(param_dtype),
            b2.astype(jnp.float32).reshape(1, -1))


@functools.partial(jax.jit, static_argnames=("block_m",))
def neural_network_forward(x, w1, b1, w2, b2, *, block_m=2048):
    """Forward pass of the Snake DQN MLP.

    x : (B, S) f32
    w1: (S, 256) in param dtype (f32 or bf16)
    b1: (1, 256) f32  (or (256,))
    w2: (256, A) in param dtype
    b2: (1, A) f32    (or (A,))
    Returns (B, A) in x.dtype.
    """
    B, S = x.shape
    A = w2.shape[-1]
    b1 = b1.reshape(1, _HIDDEN)
    b2 = b2.reshape(1, A)

    # ---- batch tiling (no feature/output padding) --------------------------
    # Keep at least 2 grid steps for large B so both v7x TensorCores get work;
    # tiles stay a multiple of 8 sublanes.
    tm = min(block_m, _round_up(pl.cdiv(B, 2), 8))
    tm = max(tm, 8)
    B_pad = _round_up(B, tm)

    # Pad only the batch dim, and only when required (zero rows are exact and
    # sliced away below).
    xp = x if B_pad == B else jnp.pad(x, ((0, B_pad - B), (0, 0)))

    grid = (B_pad // tm,)

    itemsize = jnp.dtype(w1.dtype).itemsize
    cost = pl.CostEstimate(
        flops=2 * B_pad * (S * _HIDDEN + _HIDDEN * A),
        transcendentals=0,
        bytes_accessed=(B_pad * S * x.dtype.itemsize        # x read
                        + S * _HIDDEN * itemsize            # w1
                        + _HIDDEN * A * itemsize            # w2
                        + (_HIDDEN + A) * 4                 # biases
                        + B_pad * A * x.dtype.itemsize),    # output write
    )

    out = pl.pallas_call(
        _mlp_kernel,
        out_shape=jax.ShapeDtypeStruct((B_pad, A), x.dtype),
        grid_spec=pltpu.PrefetchScalarGridSpec(
            num_scalar_prefetch=0,
            grid=grid,
            in_specs=[
                pl.BlockSpec((tm, S), lambda i: (i, 0)),          # x tile streams
                pl.BlockSpec((S, _HIDDEN), lambda i: (0, 0)),     # w1 resident
                pl.BlockSpec((1, _HIDDEN), lambda i: (0, 0)),     # b1 resident
                pl.BlockSpec((_HIDDEN, A), lambda i: (0, 0)),     # w2 resident
                pl.BlockSpec((1, A), lambda i: (0, 0)),           # b2 resident
            ],
            out_specs=pl.BlockSpec((tm, A), lambda i: (i, 0)),
        ),
        compiler_params=pltpu.CompilerParams(
            dimension_semantics=("parallel",),
        ),
        cost_estimate=cost,
    )(xp, w1, b1, w2, b2)

    return out if B_pad == B else out[:B]


def _ref_forward(x, w1, b1, w2, b2):
    h = jnp.maximum(x @ w1 + b1, 0.0)
    return h @ w2 + b2


if __name__ == "__main__":
    # Shapes consistent with the Snake DQN module:
    # state_size = 11, hidden = 256 (fixed by the module), action_size = 3.
    batch, state_size, action_size = 8, 11, 3

    key = jax.random.PRNGKey(0)
    kx, kw1, kb1, kw2, kb2 = jax.random.split(key, 5)

    x = jax.random.normal(kx, (batch, state_size), dtype=jnp.float32)
    w1 = jax.random.normal(kw1, (state_size, _HIDDEN), dtype=jnp.float32) * 0.1
    b1 = jax.random.normal(kb1, (_HIDDEN,), dtype=jnp.float32) * 0.1
    w2 = jax.random.normal(kw2, (_HIDDEN, action_size), dtype=jnp.float32) * 0.1
    b2 = jax.random.normal(kb2, (action_size,), dtype=jnp.float32) * 0.1

    ref = _ref_forward(x, w1, b1, w2, b2)

    # --- f32 params, tiny inference-style batch (single grid step) ----------
    p32 = prepare_params(w1, b1, w2, b2, param_dtype=jnp.float32)
    out = jax.block_until_ready(neural_network_forward(x, *p32))
    assert out.shape == (batch, action_size)
    assert jnp.allclose(out, ref, atol=1e-4, rtol=1e-4)

    # --- f32 params, larger non-multiple batch (2 grid steps, batch pad) ----
    big_b = 1000
    xb = jax.random.normal(kx, (big_b, state_size), dtype=jnp.float32)
    out_b = jax.block_until_ready(neural_network_forward(xb, *p32))
    ref_b = _ref_forward(xb, w1, b1, w2, b2)
    assert out_b.shape == (big_b, action_size)
    assert jnp.allclose(out_b, ref_b, atol=1e-4, rtol=1e-4)

    # --- bf16 weight storage (v6e/v7x fast path); looser tolerance expected -
    p16 = prepare_params(w1, b1, w2, b2, param_dtype=jnp.bfloat16)
    out16 = jax.block_until_ready(neural_network_forward(x, *p16))
    assert out16.shape == (batch, action_size)
    assert jnp.allclose(out16.astype(jnp.float32), ref, atol=5e-2, rtol=5e-2)

    print("KERNEL_OK")
</pallas_src>

<mosaic_0001>
module attributes {stable_mosaic.version = 11 : i64} {
  func.func @_mlp_kernel(%arg0: i32, %arg1: memref<8x11xf32, #tpu.memory_space<vmem>>, %arg2: memref<11x256xf32, #tpu.memory_space<vmem>>, %arg3: memref<1x256xf32, #tpu.memory_space<vmem>>, %arg4: memref<256x3xf32, #tpu.memory_space<vmem>>, %arg5: memref<1x3xf32, #tpu.memory_space<vmem>>, %arg6: memref<8x3xf32, #tpu.memory_space<vmem>>) attributes {dimension_semantics = [#tpu.dimension_semantics<parallel>], iteration_bounds = array<i64: 1>, scalar_prefetch = 0 : i64, scratch_operands = 0 : i64, tpu.core_type = #tpu.core_type<tc>, window_params = [{transform_indices = @transform_0, window_bounds = array<i64: 8, 11>}, {pipeline_mode = #tpu.pipeline_mode<synchronous>, transform_indices = @transform_1, window_bounds = array<i64: 11, 256>}, {pipeline_mode = #tpu.pipeline_mode<synchronous>, transform_indices = @transform_2, window_bounds = array<i64: 1, 256>}, {pipeline_mode = #tpu.pipeline_mode<synchronous>, transform_indices = @transform_3, window_bounds = array<i64: 256, 3>}, {pipeline_mode = #tpu.pipeline_mode<synchronous>, transform_indices = @transform_4, window_bounds = array<i64: 1, 3>}, {transform_indices = @transform_5, window_bounds = array<i64: 8, 3>}]} {
    %c0 = arith.constant 0 : index
    %c0_0 = arith.constant 0 : index
    %0 = vector.load %arg1[%c0, %c0_0] : memref<8x11xf32, #tpu.memory_space<vmem>>, vector<8x11xf32>
    %c0_1 = arith.constant 0 : index
    %c0_2 = arith.constant 0 : index
    %1 = vector.load %arg2[%c0_1, %c0_2] : memref<11x256xf32, #tpu.memory_space<vmem>>, vector<11x256xf32>
    %cst = arith.constant dense<0.000000e+00> : vector<8x256xf32>
    %2 = tpu.matmul %0, %1, %cst {dimension_numbers = #tpu.dot_dimension_numbers<[1], [0], [0], [1], [0, 0, 1, 1], [], []>} : vector<8x11xf32>, vector<11x256xf32>, vector<8x256xf32> -> vector<8x256xf32>
    %c0_3 = arith.constant 0 : index
    %c0_4 = arith.constant 0 : index
    %3 = vector.load %arg3[%c0_3, %c0_4] : memref<1x256xf32, #tpu.memory_space<vmem>>, vector<1x256xf32>
    %4 = vector.broadcast %3 : vector<1x256xf32> to vector<8x256xf32>
    %5 = arith.addf %2, %4 : vector<8x256xf32>
    %cst_5 = arith.constant 0.000000e+00 : f32
    %6 = vector.broadcast %cst_5 : f32 to vector<8x256xf32>
    %7 = arith.maximumf %5, %6 : vector<8x256xf32>
    %c0_6 = arith.constant 0 : index
    %c0_7 = arith.constant 0 : index
    %8 = vector.load %arg4[%c0_6, %c0_7] : memref<256x3xf32, #tpu.memory_space<vmem>>, vector<256x3xf32>
    %cst_8 = arith.constant dense<0.000000e+00> : vector<8x3xf32>
    %9 = tpu.matmul %7, %8, %cst_8 {dimension_numbers = #tpu.dot_dimension_numbers<[1], [0], [0], [1], [0, 0, 1, 1], [], []>} : vector<8x256xf32>, vector<256x3xf32>, vector<8x3xf32> -> vector<8x3xf32>
    %c0_9 = arith.constant 0 : index
    %c0_10 = arith.constant 0 : index
    %10 = vector.load %arg5[%c0_9, %c0_10] : memref<1x3xf32, #tpu.memory_space<vmem>>, vector<1x3xf32>
    %11 = vector.broadcast %10 : vector<1x3xf32> to vector<8x3xf32>
    %12 = arith.addf %9, %11 : vector<8x3xf32>
    %c0_11 = arith.constant 0 : index
    %c0_12 = arith.constant 0 : index
    %13 = vector.load %arg6[%c0_11, %c0_12] : memref<8x3xf32, #tpu.memory_space<vmem>>, vector<8x3xf32>
    tpu.vector_store %arg6[%c0_11, %c0_12], %12 {strides = array<i32>} : memref<8x3xf32, #tpu.memory_space<vmem>>, vector<8x3xf32>,
    return
  }
  func.func @transform_0(%arg0: i32) -> (i32, i32) {
    %c0_i32 = arith.constant 0 : i32
    %c0_i32_0 = arith.constant 0 : i32
    return %arg0, %c0_i32 : i32, i32
  }
  func.func @transform_1(%arg0: i32) -> (i32, i32) {
    %c0_i32 = arith.constant 0 : i32
    %c0_i32_0 = arith.constant 0 : i32
    %c0_i32_1 = arith.constant 0 : i32
    return %c0_i32, %c0_i32_0 : i32, i32
  }
  func.func @transform_2(%arg0: i32) -> (i32, i32) {
    %c0_i32 = arith.constant 0 : i32
    %c0_i32_0 = arith.constant 0 : i32
    %c0_i32_1 = arith.constant 0 : i32
    return %c0_i32, %c0_i32_0 : i32, i32
  }
  func.func @transform_3(%arg0: i32) -> (i32, i32) {
    %c0_i32 = arith.constant 0 : i32
    %c0_i32_0 = arith.constant 0 : i32
    %c0_i32_1 = arith.constant 0 : i32
    return %c0_i32, %c0_i32_0 : i32, i32
  }
  func.func @transform_4(%arg0: i32) -> (i32, i32) {
    %c0_i32 = arith.constant 0 : i32
    %c0_i32_0 = arith.constant 0 : i32
    %c0_i32_1 = arith.constant 0 : i32
    return %c0_i32, %c0_i32_0 : i32, i32
  }
  func.func @transform_5(%arg0: i32) -> (i32, i32) {
    %c0_i32 = arith.constant 0 : i32
    %c0_i32_0 = arith.constant 0 : i32
    return %arg0, %c0_i32 : i32, i32
  }
}

</mosaic_0001>

<llo_original>
// kernel: neural_network_forward.1
$region0: #{neural_network_forward.1}
  #allocation0 [shape = 'u32[]', space=smem, size = 0x4, offset = 0x4, fixed_abs, tag = 'smem constant byte address 0x4 - core index']
  #allocation1 [shape = 'u32[144,128]{1,0:T(1,128)}', space=vmem, size = 0x12000, scoped, tag = 'internal scratch']
  %s0 = inlined_call_operand.vmem [shape: f32[8,11], index: 0, kind: input, shape index: {}]
  %s1 = inlined_call_operand.vmem [shape: f32[11,256], index: 1, kind: input, shape index: {}]
  %s2 = inlined_call_operand.vmem [shape: f32[1,256], index: 2, kind: input, shape index: {}]
  %s3 = inlined_call_operand.vmem [shape: f32[256,3], index: 3, kind: input, shape index: {}]
  %s4 = inlined_call_operand.vmem [shape: f32[1,3], index: 4, kind: input, shape index: {}]
  %s5 = inlined_call_operand.vmem [shape: f32[8,3], index: 5, kind: output, shape index: {}]
  %s6 = sld [smem:[#allocation0]]
  $region30: #{neural_network_forward.1} parent=0
    _
  %s8 = ssub.s32 1, %s6
  %s9 = scalar_select 0, %s8, %s6
  // Predicated region
  $region2: #{neural_network_forward.1} parent=0 // pred_check
    _
  $region3: #{neural_network_forward.1} parent=0 // pred_check_branch
    %11 = sbr.rel (0) target = $region5
  $region4: #{neural_network_forward.1} parent=0 // pred_region
    _
  $region5: #{neural_network_forward.1} parent=0 // pred_fallthru
    _
  // Predicated region
  $region6: #{neural_network_forward.1} parent=0 // pred_check
    _
  $region7: #{neural_network_forward.1} parent=0 // pred_check_branch
    %13 = sbr.rel (0) target = $region9
  $region8: #{neural_network_forward.1} parent=0 // pred_region
    _
  $region9: #{neural_network_forward.1} parent=0 // pred_fallthru
    _
  // Predicated region
  $region10: #{neural_network_forward.1} parent=0 // pred_check
    _
  $region11: #{neural_network_forward.1} parent=0 // pred_check_branch
    %15 = sbr.rel (0) target = $region13
  $region12: #{neural_network_forward.1} parent=0 // pred_region
    _
  $region13: #{neural_network_forward.1} parent=0 // pred_fallthru
    _
  // Predicated region
  $region14: #{neural_network_forward.1} parent=0 // pred_check
    _
  $region15: #{neural_network_forward.1} parent=0 // pred_check_branch
    %17 = sbr.rel (0) target = $region17
  $region16: #{neural_network_forward.1} parent=0 // pred_region
    _
  $region17: #{neural_network_forward.1} parent=0 // pred_fallthru
    _
  // Predicated region
  $region18: #{neural_network_forward.1} parent=0 // pred_check
    _
  $region19: #{neural_network_forward.1} parent=0 // pred_check_branch
    %19 = sbr.rel (0) target = $region21
  $region20: #{neural_network_forward.1} parent=0 // pred_region
    _
  $region21: #{neural_network_forward.1} parent=0 // pred_fallthru
    _
  %v20 = vld [vmem:[%s0] sm:$0xff]
  %v21 = vld [vmem:[%s1] sm:$0xff]
  %v22 = vld [vmem:[%s1 + $0x8] sm:$0xff]
  %v23 = vld [vmem:[%s1 + $0x10] sm:$0x7]
  %v24 = vld [vmem:[%s1 + $0x18] sm:$0x7]
  %v25 = vld [vmem:[%s2] sm:$0x3]
  %v27 = vlaneseq
  %v28 = vshrl.u32 %v27, 7
  %v29 = vsub.s32 0, %v28
  %v30 = vrot.slane %v25, %v29
  %v31 = vlaneseq
  %v32 = vshrl.u32 %v31, 7
  %v33 = vsub.s32 1, %v32
  %v34 = vrot.slane %v25, %v33
  %vm37 = vcmask 89088
  %v39 = vsel %vm37, %v20, 0
  %vm41 = vcmask 1042432
  %v43 = vsel %vm41, %v23, 0
  %v46 = vsel %vm41, %v24, 0
  %48 = vmatprep.subr.mxu0 %v22
  %49 = vmatpush1.msra.mxu0 %v21
  %50 = vmatprep.subr.mxu0 %v46
  %51 = vmatpush1.msra.mxu0 %v43
  %52 = vmatprep.subr.mxu0 0.0
  %53 = vmatpush1.msra.mxu0 0.0
  %54 = vmatprep.subr.mxu0 0.0
  %55 = vmatpush1.msra.mxu0 0.0
  %56 = vmatprep.subr.mxu0 0.0
  %57 = vmatpush1.msra.mxu0 0.0
  %58 = vmatprep.subr.mxu0 0.0
  %59 = vmatpush1.msra.mxu0 0.0
  %60 = vmatprep.subr.mxu0 0.0
  %61 = vmatpush1.msra.mxu0 0.0
  %62 = vmatprep.subr.mxu0 0.0
  %63 = vmatpush1.msra.mxu0 0.0
  %64 = vmatprep.subr.mxu0 0.0
  %65 = vmatpush1.msra.mxu0 0.0
  %66 = vmatprep.subr.mxu0 0.0
  %67 = vmatpush1.msra.mxu0 0.0
  %68 = vmatprep.subr.mxu0 0.0
  %69 = vmatpush1.msra.mxu0 0.0
  %70 = vmatprep.subr.mxu0 0.0
  %71 = vmatpush1.msra.mxu0 0.0
  %72 = vmatprep.subr.mxu0 0.0
  %73 = vmatpush1.msra.mxu0 0.0
  %74 = vmatprep.subr.mxu0 0.0
  %75 = vmatpush1.msra.mxu0 0.0
  %76 = vmatprep.subr.mxu0 0.0
  %77 = vmatpush1.msra.mxu0 0.0
  %78 = vmatprep.subr.mxu0 0.0
  %79 = vmatpush1.msra.mxu0 0.0
  %80 = vmatprep.subr.mxu0 0.0
  %81 = vmatpush1.msra.mxu0 0.0
  %82 = vmatprep.subr.mxu0 0.0
  %83 = vmatpush1.msra.mxu0 0.0
  %84 = vmatprep.subr.mxu0 0.0
  %85 = vmatpush1.msra.mxu0 0.0
  %86 = vmatprep.subr.mxu0 0.0
  %87 = vmatpush1.msra.mxu0 0.0
  %88 = vmatprep.subr.mxu0 0.0
  %89 = vmatpush1.msra.mxu0 0.0
  %90 = vmatprep.subr.mxu0 0.0
  %91 = vmatpush1.msra.mxu0 0.0
  %92 = vmatprep.subr.mxu0 0.0
  %93 = vmatpush1.msra.mxu0 0.0
  %94 = vmatprep.subr.mxu0 0.0
  %95 = vmatpush1.msra.mxu0 0.0
  %96 = vmatprep.subr.mxu0 0.0
  %97 = vmatpush1.msra.mxu0 0.0
  %98 = vmatprep.subr.mxu0 0.0
  %99 = vmatpush1.msra.mxu0 0.0
  %100 = vmatprep.subr.mxu0 0.0
  %101 = vmatpush1.msra.mxu0 0.0
  %102 = vmatprep.subr.mxu0 0.0
  %103 = vmatpush1.msra.mxu0 0.0
  %104 = vmatprep.subr.mxu0 0.0
  %105 = vmatpush1.msra.mxu0 0.0
  %106 = vmatprep.subr.mxu0 0.0
  %107 = vmatpush1.msra.mxu0 0.0
  %108 = vmatprep.subr.mxu0 0.0
  %109 = vmatpush1.msra.mxu0 0.0
  %110 = vmatprep.subr.mxu0 0.0
  %111 = vmatpush1.msra.mxu0 0.0
  %112 = vmatprep.mubr.f32.mxu0 0.0
  %113 = vmatmul.mubr.f32.gmra.mrb[0].mxu0 %v39
  %v114 = vpop.f32.mrb[0].mxu0
  %v115 = vadd.f32 %v30, %v114
  %v116 = vpop.f32.mrb[0].mxu0
  %v117 = vadd.f32 %v34, %v116
  %118 = vdwg.mxu0
  %v119 = vmax.f32 %v115, 0.0
  %v120 = vmax.f32 %v117, 0.0
  %v121 = vld [vmem:[%s3] sm:$0xff]
  %v122 = vld [vmem:[%s3 + $0x8] sm:$0xff]
  %v123 = vld [vmem:[%s3 + $0x10] sm:$0xff]
  %v124 = vld [vmem:[%s3 + $0x18] sm:$0xff]
  %v125 = vld [vmem:[%s3 + $0x20] sm:$0xff]
  %v126 = vld [vmem:[%s3 + $0x28] sm:$0xff]
  %v127 = vld [vmem:[%s3 + $0x30] sm:$0xff]
  %v128 = vld [vmem:[%s3 + $0x38] sm:$0xff]
  %v129 = vld [vmem:[%s3 + $0x40] sm:$0xff]
  %v130 = vld [vmem:[%s3 + $0x48] sm:$0xff]
  %v131 = vld [vmem:[%s3 + $0x50] sm:$0xff]
  %v132 = vld [vmem:[%s3 + $0x58] sm:$0xff]
  %v133 = vld [vmem:[%s3 + $0x60] sm:$0xff]
  %v134 = vld [vmem:[%s3 + $0x68] sm:$0xff]
  %v135 = vld [vmem:[%s3 + $0x70] sm:$0xff]
  %v136 = vld [vmem:[%s3 + $0x78] sm:$0xff]
  %v137 = vld [vmem:[%s3 + $0x80] sm:$0xff]
  %v138 = vld [vmem:[%s3 + $0x88] sm:$0xff]
  %v139 = vld [vmem:[%s3 + $0x90] sm:$0xff]
  %v140 = vld [vmem:[%s3 + $0x98] sm:$0xff]
  %v141 = vld [vmem:[%s3 + $0xa0] sm:$0xff]
  %v142 = vld [vmem:[%s3 + $0xa8] sm:$0xff]
  %v143 = vld [vmem:[%s3 + $0xb0] sm:$0xff]
  %v144 = vld [vmem:[%s3 + $0xb8] sm:$0xff]
  %v145 = vld [vmem:[%s3 + $0xc0] sm:$0xff]
  %v146 = vld [vmem:[%s3 + $0xc8] sm:$0xff]
  %v147 = vld [vmem:[%s3 + $0xd0] sm:$0xff]
  %v148 = vld [vmem:[%s3 + $0xd8] sm:$0xff]
  %v149 = vld [vmem:[%s3 + $0xe0] sm:$0xff]
  %v150 = vld [vmem:[%s3 + $0xe8] sm:$0xff]
  %v151 = vld [vmem:[%s3 + $0xf0] sm:$0xff]
  %v152 = vld [vmem:[%s3 + $0xf8] sm:$0xff]
  %v153 = vld [vmem:[%s4] sm:$0x1]
  %v155 = vlaneseq
  %v156 = vshrl.u32 %v155, 7
  %v157 = vsub.s32 0, %v156
  %v158 = vrot.slane %v153, %v157
  %160 = vmatprep.subr.mxu0 0.0
  %161 = vmatpush1.msra.mxu0 %v121
  %162 = vmatprep.subr.mxu0 0.0
  %163 = vmatpush1.msra.mxu0 %v122
  %164 = vmatprep.subr.mxu0 0.0
  %165 = vmatpush1.msra.mxu0 %v123
  %166 = vmatprep.subr.mxu0 0.0
  %167 = vmatpush1.msra.mxu0 %v124
  %168 = vmatprep.subr.mxu0 0.0
  %169 = vmatpush1.msra.mxu0 %v125
  %170 = vmatprep.subr.mxu0 0.0
  %171 = vmatpush1.msra.mxu0 %v126
  %172 = vmatprep.subr.mxu0 0.0
  %173 = vmatpush1.msra.mxu0 %v127
  %174 = vmatprep.subr.mxu0 0.0
  %175 = vmatpush1.msra.mxu0 %v128
  %176 = vmatprep.subr.mxu0 0.0
  %177 = vmatpush1.msra.mxu0 %v129
  %178 = vmatprep.subr.mxu0 0.0
  %179 = vmatpush1.msra.mxu0 %v130
  %180 = vmatprep.subr.mxu0 0.0
  %181 = vmatpush1.msra.mxu0 %v131
  %182 = vmatprep.subr.mxu0 0.0
  %183 = vmatpush1.msra.mxu0 %v132
  %184 = vmatprep.subr.mxu0 0.0
  %185 = vmatpush1.msra.mxu0 %v133
  %186 = vmatprep.subr.mxu0 0.0
  %187 = vmatpush1.msra.mxu0 %v134
  %188 = vmatprep.subr.mxu0 0.0
  %189 = vmatpush1.msra.mxu0 %v135
  %190 = vmatprep.subr.mxu0 0.0
  %191 = vmatpush1.msra.mxu0 %v136
  %192 = vmatprep.subr.mxu0 0.0
  %193 = vmatpush1.msra.mxu0 %v137
  %194 = vmatprep.subr.mxu0 0.0
  %195 = vmatpush1.msra.mxu0 %v138
  %196 = vmatprep.subr.mxu0 0.0
  %197 = vmatpush1.msra.mxu0 %v139
  %198 = vmatprep.subr.mxu0 0.0
  %199 = vmatpush1.msra.mxu0 %v140
  %200 = vmatprep.subr.mxu0 0.0
  %201 = vmatpush1.msra.mxu0 %v141
  %202 = vmatprep.subr.mxu0 0.0
  %203 = vmatpush1.msra.mxu0 %v142
  %204 = vmatprep.subr.mxu0 0.0
  %205 = vmatpush1.msra.mxu0 %v143
  %206 = vmatprep.subr.mxu0 0.0
  %207 = vmatpush1.msra.mxu0 %v144
  %208 = vmatprep.subr.mxu0 0.0
  %209 = vmatpush1.msra.mxu0 %v145
  %210 = vmatprep.subr.mxu0 0.0
  %211 = vmatpush1.msra.mxu0 %v146
  %212 = vmatprep.subr.mxu0 0.0
  %213 = vmatpush1.msra.mxu0 %v147
  %214 = vmatprep.subr.mxu0 0.0
  %215 = vmatpush1.msra.mxu0 %v148
  %216 = vmatprep.subr.mxu0 0.0
  %217 = vmatpush1.msra.mxu0 %v149
  %218 = vmatprep.subr.mxu0 0.0
  %219 = vmatpush1.msra.mxu0 %v150
  %220 = vmatprep.subr.mxu0 0.0
  %221 = vmatpush1.msra.mxu0 %v151
  %222 = vmatprep.subr.mxu0 0.0
  %223 = vmatpush1.msra.mxu0 %v152
  %224 = vmatprep.mubr.f32.mxu0 %v120
  %225 = vmatmul.mubr.f32.gmra.mrb[0].mxu0 %v119
  %v226 = vpop.f32.mrb[0].mxu0
  %v227 = vadd.f32 %v158, %v226
  %v228 = vpop.f32.mrb[0].mxu0
  %229 = vdwg.mxu0
  %vm230 = vcmask 23552
  %231 = vst.msk [vmem:[%s5] sm:$0xff] %vm230, %v227
  // Predicated region
  $region22: #{neural_network_forward.1} parent=0 // pred_check
    _
  $region23: #{neural_network_forward.1} parent=0 // pred_check_branch
    %233 = sbr.rel (0) target = $region25
  $region24: #{neural_network_forward.1} parent=0 // pred_region
    _
  $region25: #{neural_network_forward.1} parent=0 // pred_fallthru
    _
  // Predicated region
  $region26: #{neural_network_forward.1} parent=0 // pred_check
    _
  $region27: #{neural_network_forward.1} parent=0 // pred_check_branch
    %235 = sbr.rel (0) target = $region29
  $region28: #{neural_network_forward.1} parent=0 // pred_region
    _
  $region29: #{neural_network_forward.1} parent=0 // pred_fallthru
    _

</llo_original>
